<compile_context>
chip_gen: v7x
topology: tpu7x:2x2x1
jax: 0.10.0
libtpu: 0.0.40
codegen_flags: <defaults>
</compile_context>

<pallas_src>
import functools

import jax
import jax.numpy as jnp
from jax.experimental import pallas as pl
from jax.experimental.pallas import tpu as pltpu


def _affine_sigmoid_kernel(x_ref, w_ref, b_ref, o_ref):
    """o = sigmoid(x @ W + b) for one batch tile (contraction on the MXU)."""
    acc = jnp.dot(x_ref[...], w_ref[...], preferred_element_type=jnp.float32)
    acc = acc + b_ref[...]                      # (1, c_out) broadcast over rows
    o_ref[...] = jax.nn.sigmoid(acc).astype(o_ref.dtype)


def _round_up(x, m):
    return ((x + m - 1) // m) * m


def fold_params(params):
    """Collapse the four bias-affine layers into one (exact: no nonlinearity between)."""
    (w1, b1), (w2, b2), (w3, b3), (w4, b4) = params
    w_eff = w1 @ w2 @ w3 @ w4
    b_eff = ((b1 @ w2 + b2) @ w3 + b3) @ w4 + b4
    return w_eff, b_eff.reshape(1, -1)


@functools.partial(jax.jit, static_argnames=("tile_m", "single_step_cap"))
def mlp_forward(x, w_eff, b_eff, tile_m=2048, single_step_cap=4096):
    """sigmoid(x @ w_eff + b_eff).  x: [N, C_in] f32 -> [N, C_out] f32."""
    n, c_in = x.shape
    c_out = w_eff.shape[1]
    b2d = b_eff.reshape(1, c_out)

    if n <= single_step_cap:
        # One grid step: block batch dim equals the full array dim, so any N is
        # legal (no divisible-by-8 requirement) and there is no pad/slice.
        tm, n_pad, x_p = n, n, x
    else:
        # Large-N path: multiple-of-8 batch tile; pad only if the tile is ragged.
        tm = max(8, (min(tile_m, n) // 8) * 8)
        n_pad = _round_up(n, tm)
        x_p = x if n_pad == n else jnp.pad(x, ((0, n_pad - n), (0, 0)))

    # VMEM: (tm, c) f32 blocks lane-pad to 128 in VMEM (~512*tm B/block; with
    # double buffering of x and out ~2 KiB * tm).  Raise the scoped limit only
    # when a swept tile needs more than the smallest default (16 MiB on v5e;
    # 32 MiB on v6e/v7x; 64 MiB physical ceiling on v7x).
    vmem_need = 2 * 2 * (tm * 128 * 4) + (2 << 20)
    vmem_limit = vmem_need if vmem_need > (16 << 20) else None

    cost = pl.CostEstimate(
        flops=2 * n_pad * c_in * c_out,
        transcendentals=n_pad * c_out,
        bytes_accessed=4 * (n_pad * c_in + n_pad * c_out + c_in * c_out + c_out),
    )

    out = pl.pallas_call(
        _affine_sigmoid_kernel,
        out_shape=jax.ShapeDtypeStruct((n_pad, c_out), jnp.float32),
        grid_spec=pltpu.PrefetchScalarGridSpec(
            num_scalar_prefetch=0,
            grid=(n_pad // tm,),
            in_specs=[
                pl.BlockSpec((tm, c_in), lambda i: (i, 0)),      # x: tiled over batch
                pl.BlockSpec((c_in, c_out), lambda i: (0, 0)),   # W_eff: resident
                pl.BlockSpec((1, c_out), lambda i: (0, 0)),      # b_eff: resident
            ],
            out_specs=pl.BlockSpec((tm, c_out), lambda i: (i, 0)),
        ),
        compiler_params=pltpu.CompilerParams(
            dimension_semantics=("arbitrary",),
            vmem_limit_bytes=vmem_limit),
        cost_estimate=cost,
    )(x_p, w_eff, b2d)

    return out if n_pad == n else out[:n]


def init_params(key, n_varc, hidden_size, out_size=23):
    """nn.Linear-style U(-1/sqrt(fan_in), 1/sqrt(fan_in)) init; weights stored [in, out]."""
    dims = [(n_varc, hidden_size), (hidden_size, hidden_size),
            (hidden_size, hidden_size), (hidden_size, out_size)]
    params = []
    for (fan_in, fan_out) in dims:
        key, kw, kb = jax.random.split(key, 3)
        bound = 1.0 / (fan_in ** 0.5)
        w = jax.random.uniform(kw, (fan_in, fan_out), jnp.float32, -bound, bound)
        b = jax.random.uniform(kb, (fan_out,), jnp.float32, -bound, bound)
        params.append((w, b))
    return params


def reference_forward(x, params):
    """Un-folded 4-layer reference (mirrors the PyTorch forward exactly)."""
    h = x
    for (w, b) in params:
        h = h @ w + b
    return jax.nn.sigmoid(h)


if __name__ == "__main__":
    key = jax.random.PRNGKey(0)
    # config['optData']['varC'] ~ 4 attributes; hidden_size = 32; output = 23.
    n_varc, hidden, batch = 4, 32, 512
    k_x, k_p = jax.random.split(key)
    x = jax.random.normal(k_x, (batch, n_varc), jnp.float32)
    params = init_params(k_p, n_varc, hidden)

    # Fold once, outside the per-call jit path (weights are static across calls).
    w_eff, b_eff = fold_params(params)

    out = mlp_forward(x, w_eff, b_eff)        # batch=512 <= cap -> grid=(1,), no pad
    out = jax.block_until_ready(out)

    ref = reference_forward(x, params)
    assert out.shape == (batch, 23), out.shape
    max_err = float(jnp.max(jnp.abs(out - ref)))
    assert jnp.allclose(out, ref, atol=2e-5, rtol=2e-5), max_err
    print("KERNEL_OK")
</pallas_src>

<mosaic_0001>
module attributes {stable_mosaic.version = 11 : i64} {
  func.func @_affine_sigmoid_kernel(%arg0: i32, %arg1: memref<512x4xf32, #tpu.memory_space<vmem>>, %arg2: memref<4x23xf32, #tpu.memory_space<vmem>>, %arg3: memref<1x23xf32, #tpu.memory_space<vmem>>, %arg4: memref<512x23xf32, #tpu.memory_space<vmem>>) attributes {dimension_semantics = [#tpu.dimension_semantics<arbitrary>], iteration_bounds = array<i64: 1>, scalar_prefetch = 0 : i64, scratch_operands = 0 : i64, tpu.core_type = #tpu.core_type<tc>, window_params = [{transform_indices = @transform_0, window_bounds = array<i64: 512, 4>}, {pipeline_mode = #tpu.pipeline_mode<synchronous>, transform_indices = @transform_1, window_bounds = array<i64: 4, 23>}, {pipeline_mode = #tpu.pipeline_mode<synchronous>, transform_indices = @transform_2, window_bounds = array<i64: 1, 23>}, {transform_indices = @transform_3, window_bounds = array<i64: 512, 23>}]} {
    %c0 = arith.constant 0 : index
    %c0_0 = arith.constant 0 : index
    %0 = vector.load %arg1[%c0, %c0_0] : memref<512x4xf32, #tpu.memory_space<vmem>>, vector<512x4xf32>
    %c0_1 = arith.constant 0 : index
    %c0_2 = arith.constant 0 : index
    %1 = vector.load %arg2[%c0_1, %c0_2] : memref<4x23xf32, #tpu.memory_space<vmem>>, vector<4x23xf32>
    %cst = arith.constant dense<0.000000e+00> : vector<512x23xf32>
    %2 = tpu.matmul %0, %1, %cst {dimension_numbers = #tpu.dot_dimension_numbers<[1], [0], [0], [1], [0, 0, 1, 1], [], []>} : vector<512x4xf32>, vector<4x23xf32>, vector<512x23xf32> -> vector<512x23xf32>
    %c0_3 = arith.constant 0 : index
    %c0_4 = arith.constant 0 : index
    %3 = vector.load %arg3[%c0_3, %c0_4] : memref<1x23xf32, #tpu.memory_space<vmem>>, vector<1x23xf32>
    %4 = vector.broadcast %3 : vector<1x23xf32> to vector<512x23xf32>
    %5 = arith.addf %2, %4 : vector<512x23xf32>
    %6 = arith.negf %5 : vector<512x23xf32>
    %7 = math.exp %6 : vector<512x23xf32>
    %cst_5 = arith.constant 1.000000e+00 : f32
    %8 = vector.broadcast %cst_5 : f32 to vector<512x23xf32>
    %9 = arith.addf %8, %7 : vector<512x23xf32>
    %10 = arith.divf %8, %9 : vector<512x23xf32>
    %c0_6 = arith.constant 0 : index
    %c0_7 = arith.constant 0 : index
    %11 = vector.load %arg4[%c0_6, %c0_7] : memref<512x23xf32, #tpu.memory_space<vmem>>, vector<512x23xf32>
    tpu.vector_store %arg4[%c0_6, %c0_7], %10 {strides = array<i32>} : memref<512x23xf32, #tpu.memory_space<vmem>>, vector<512x23xf32>,
    return
  }
  func.func @transform_0(%arg0: i32) -> (i32, i32) {
    %c0_i32 = arith.constant 0 : i32
    %c0_i32_0 = arith.constant 0 : i32
    return %arg0, %c0_i32 : i32, i32
  }
  func.func @transform_1(%arg0: i32) -> (i32, i32) {
    %c0_i32 = arith.constant 0 : i32
    %c0_i32_0 = arith.constant 0 : i32
    %c0_i32_1 = arith.constant 0 : i32
    return %c0_i32, %c0_i32_0 : i32, i32
  }
  func.func @transform_2(%arg0: i32) -> (i32, i32) {
    %c0_i32 = arith.constant 0 : i32
    %c0_i32_0 = arith.constant 0 : i32
    %c0_i32_1 = arith.constant 0 : i32
    return %c0_i32, %c0_i32_0 : i32, i32
  }
  func.func @transform_3(%arg0: i32) -> (i32, i32) {
    %c0_i32 = arith.constant 0 : i32
    %c0_i32_0 = arith.constant 0 : i32
    return %arg0, %c0_i32 : i32, i32
  }
}

</mosaic_0001>

<llo_original>
// kernel: mlp_forward.1
$region0: #{mlp_forward.1}
  #allocation0 [shape = 'u32[]', space=smem, size = 0x4, offset = 0x4, fixed_abs, tag = 'smem constant byte address 0x4 - core index']
  #allocation1 [shape = 'u32[144,128]{1,0:T(1,128)}', space=vmem, size = 0x12000, scoped, tag = 'internal scratch']
  %s0 = inlined_call_operand.vmem [shape: f32[512,4], index: 0, kind: input, shape index: {}]
  %s1 = inlined_call_operand.vmem [shape: f32[4,23], index: 1, kind: input, shape index: {}]
  %s2 = inlined_call_operand.vmem [shape: f32[1,23], index: 2, kind: input, shape index: {}]
  %s3 = inlined_call_operand.vmem [shape: f32[512,23], index: 3, kind: output, shape index: {}]
  %s4 = sld [smem:[#allocation0]]
  $region22: #{mlp_forward.1} parent=0
    _
  %s6 = ssub.s32 1, %s4
  %s7 = scalar_select 0, %s6, %s4
  // Predicated region
  $region2: #{mlp_forward.1} parent=0 // pred_check
    _
  $region3: #{mlp_forward.1} parent=0 // pred_check_branch
    %9 = sbr.rel (0) target = $region5
  $region4: #{mlp_forward.1} parent=0 // pred_region
    _
  $region5: #{mlp_forward.1} parent=0 // pred_fallthru
    _
  // Predicated region
  $region6: #{mlp_forward.1} parent=0 // pred_check
    _
  $region7: #{mlp_forward.1} parent=0 // pred_check_branch
    %11 = sbr.rel (0) target = $region9
  $region8: #{mlp_forward.1} parent=0 // pred_region
    _
  $region9: #{mlp_forward.1} parent=0 // pred_fallthru
    _
  // Predicated region
  $region10: #{mlp_forward.1} parent=0 // pred_check
    _
  $region11: #{mlp_forward.1} parent=0 // pred_check_branch
    %13 = sbr.rel (0) target = $region13
  $region12: #{mlp_forward.1} parent=0 // pred_region
    _
  $region13: #{mlp_forward.1} parent=0 // pred_fallthru
    _
  %v14 = vld [vmem:[%s0] sm:$0xff]
  %v15 = vld [vmem:[%s0 + $0x8] sm:$0xff]
  %v16 = vld [vmem:[%s0 + $0x10] sm:$0xff]
  %v17 = vld [vmem:[%s0 + $0x18] sm:$0xff]
  %v18 = vld [vmem:[%s0 + $0x20] sm:$0xff]
  %v19 = vld [vmem:[%s0 + $0x28] sm:$0xff]
  %v20 = vld [vmem:[%s0 + $0x30] sm:$0xff]
  %v21 = vld [vmem:[%s0 + $0x38] sm:$0xff]
  %v22 = vld [vmem:[%s0 + $0x40] sm:$0xff]
  %v23 = vld [vmem:[%s0 + $0x48] sm:$0xff]
  %v24 = vld [vmem:[%s0 + $0x50] sm:$0xff]
  %v25 = vld [vmem:[%s0 + $0x58] sm:$0xff]
  %v26 = vld [vmem:[%s0 + $0x60] sm:$0xff]
  %v27 = vld [vmem:[%s0 + $0x68] sm:$0xff]
  %v28 = vld [vmem:[%s0 + $0x70] sm:$0xff]
  %v29 = vld [vmem:[%s0 + $0x78] sm:$0xff]
  %v30 = vld [vmem:[%s0 + $0x80] sm:$0xff]
  %v31 = vld [vmem:[%s0 + $0x88] sm:$0xff]
  %v32 = vld [vmem:[%s0 + $0x90] sm:$0xff]
  %v33 = vld [vmem:[%s0 + $0x98] sm:$0xff]
  %v34 = vld [vmem:[%s0 + $0xa0] sm:$0xff]
  %v35 = vld [vmem:[%s0 + $0xa8] sm:$0xff]
  %v36 = vld [vmem:[%s0 + $0xb0] sm:$0xff]
  %v37 = vld [vmem:[%s0 + $0xb8] sm:$0xff]
  %v38 = vld [vmem:[%s0 + $0xc0] sm:$0xff]
  %v39 = vld [vmem:[%s0 + $0xc8] sm:$0xff]
  %v40 = vld [vmem:[%s0 + $0xd0] sm:$0xff]
  %v41 = vld [vmem:[%s0 + $0xd8] sm:$0xff]
  %v42 = vld [vmem:[%s0 + $0xe0] sm:$0xff]
  %v43 = vld [vmem:[%s0 + $0xe8] sm:$0xff]
  %v44 = vld [vmem:[%s0 + $0xf0] sm:$0xff]
  %v45 = vld [vmem:[%s0 + $0xf8] sm:$0xff]
  %v46 = vld [vmem:[%s0 + $0x100] sm:$0xff]
  %v47 = vld [vmem:[%s0 + $0x108] sm:$0xff]
  %v48 = vld [vmem:[%s0 + $0x110] sm:$0xff]
  %v49 = vld [vmem:[%s0 + $0x118] sm:$0xff]
  %v50 = vld [vmem:[%s0 + $0x120] sm:$0xff]
  %v51 = vld [vmem:[%s0 + $0x128] sm:$0xff]
  %v52 = vld [vmem:[%s0 + $0x130] sm:$0xff]
  %v53 = vld [vmem:[%s0 + $0x138] sm:$0xff]
  %v54 = vld [vmem:[%s0 + $0x140] sm:$0xff]
  %v55 = vld [vmem:[%s0 + $0x148] sm:$0xff]
  %v56 = vld [vmem:[%s0 + $0x150] sm:$0xff]
  %v57 = vld [vmem:[%s0 + $0x158] sm:$0xff]
  %v58 = vld [vmem:[%s0 + $0x160] sm:$0xff]
  %v59 = vld [vmem:[%s0 + $0x168] sm:$0xff]
  %v60 = vld [vmem:[%s0 + $0x170] sm:$0xff]
  %v61 = vld [vmem:[%s0 + $0x178] sm:$0xff]
  %v62 = vld [vmem:[%s0 + $0x180] sm:$0xff]
  %v63 = vld [vmem:[%s0 + $0x188] sm:$0xff]
  %v64 = vld [vmem:[%s0 + $0x190] sm:$0xff]
  %v65 = vld [vmem:[%s0 + $0x198] sm:$0xff]
  %v66 = vld [vmem:[%s0 + $0x1a0] sm:$0xff]
  %v67 = vld [vmem:[%s0 + $0x1a8] sm:$0xff]
  %v68 = vld [vmem:[%s0 + $0x1b0] sm:$0xff]
  %v69 = vld [vmem:[%s0 + $0x1b8] sm:$0xff]
  %v70 = vld [vmem:[%s0 + $0x1c0] sm:$0xff]
  %v71 = vld [vmem:[%s0 + $0x1c8] sm:$0xff]
  %v72 = vld [vmem:[%s0 + $0x1d0] sm:$0xff]
  %v73 = vld [vmem:[%s0 + $0x1d8] sm:$0xff]
  %v74 = vld [vmem:[%s0 + $0x1e0] sm:$0xff]
  %v75 = vld [vmem:[%s0 + $0x1e8] sm:$0xff]
  %v76 = vld [vmem:[%s0 + $0x1f0] sm:$0xff]
  %v77 = vld [vmem:[%s0 + $0x1f8] sm:$0xff]
  %v78 = vld [vmem:[%s1] sm:$0xf]
  %v79 = vld [vmem:[%s2] sm:$0x1]
  %v81 = vlaneseq
  %v82 = vshrl.u32 %v81, 7
  %v83 = vsub.s32 0, %v82
  %v84 = vrot.slane %v79, %v83
  %vm86 = vcmask 31744
  %v88 = vsel %vm86, %v14, 0
  %v91 = vsel %vm86, %v15, 0
  %v94 = vsel %vm86, %v16, 0
  %v97 = vsel %vm86, %v17, 0
  %v100 = vsel %vm86, %v18, 0
  %v103 = vsel %vm86, %v19, 0
  %v106 = vsel %vm86, %v20, 0
  %v109 = vsel %vm86, %v21, 0
  %v112 = vsel %vm86, %v22, 0
  %v115 = vsel %vm86, %v23, 0
  %v118 = vsel %vm86, %v24, 0
  %v121 = vsel %vm86, %v25, 0
  %v124 = vsel %vm86, %v26, 0
  %v127 = vsel %vm86, %v27, 0
  %v130 = vsel %vm86, %v28, 0
  %v133 = vsel %vm86, %v29, 0
  %v136 = vsel %vm86, %v30, 0
  %v139 = vsel %vm86, %v31, 0
  %v142 = vsel %vm86, %v32, 0
  %v145 = vsel %vm86, %v33, 0
  %v148 = vsel %vm86, %v34, 0
  %v151 = vsel %vm86, %v35, 0
  %v154 = vsel %vm86, %v36, 0
  %v157 = vsel %vm86, %v37, 0
  %v160 = vsel %vm86, %v38, 0
  %v163 = vsel %vm86, %v39, 0
  %v166 = vsel %vm86, %v40, 0
  %v169 = vsel %vm86, %v41, 0
  %v172 = vsel %vm86, %v42, 0
  %v175 = vsel %vm86, %v43, 0
  %v178 = vsel %vm86, %v44, 0
  %v181 = vsel %vm86, %v45, 0
  %v184 = vsel %vm86, %v46, 0
  %v187 = vsel %vm86, %v47, 0
  %v190 = vsel %vm86, %v48, 0
  %v193 = vsel %vm86, %v49, 0
  %v196 = vsel %vm86, %v50, 0
  %v199 = vsel %vm86, %v51, 0
  %v202 = vsel %vm86, %v52, 0
  %v205 = vsel %vm86, %v53, 0
  %v208 = vsel %vm86, %v54, 0
  %v211 = vsel %vm86, %v55, 0
  %v214 = vsel %vm86, %v56, 0
  %v217 = vsel %vm86, %v57, 0
  %v220 = vsel %vm86, %v58, 0
  %v223 = vsel %vm86, %v59, 0
  %v226 = vsel %vm86, %v60, 0
  %v229 = vsel %vm86, %v61, 0
  %v232 = vsel %vm86, %v62, 0
  %v235 = vsel %vm86, %v63, 0
  %v238 = vsel %vm86, %v64, 0
  %v241 = vsel %vm86, %v65, 0
  %v244 = vsel %vm86, %v66, 0
  %v247 = vsel %vm86, %v67, 0
  %v250 = vsel %vm86, %v68, 0
  %v253 = vsel %vm86, %v69, 0
  %v256 = vsel %vm86, %v70, 0
  %v259 = vsel %vm86, %v71, 0
  %v262 = vsel %vm86, %v72, 0
  %v265 = vsel %vm86, %v73, 0
  %v268 = vsel %vm86, %v74, 0
  %v271 = vsel %vm86, %v75, 0
  %v274 = vsel %vm86, %v76, 0
  %v277 = vsel %vm86, %v77, 0
  %vm279 = vcmask 1043456
  %v281 = vsel %vm279, %v78, 0
  %283 = vmatprep.subr.mxu0 0.0
  %284 = vmatpush1.msra.mxu0 %v281
  %285 = vmatprep.subr.mxu0 0.0
  %286 = vmatpush1.msra.mxu0 0.0
  %287 = vmatprep.subr.mxu0 0.0
  %288 = vmatpush1.msra.mxu0 0.0
  %289 = vmatprep.subr.mxu0 0.0
  %290 = vmatpush1.msra.mxu0 0.0
  %291 = vmatprep.subr.mxu0 0.0
  %292 = vmatpush1.msra.mxu0 0.0
  %293 = vmatprep.subr.mxu0 0.0
  %294 = vmatpush1.msra.mxu0 0.0
  %295 = vmatprep.subr.mxu0 0.0
  %296 = vmatpush1.msra.mxu0 0.0
  %297 = vmatprep.subr.mxu0 0.0
  %298 = vmatpush1.msra.mxu0 0.0
  %299 = vmatprep.subr.mxu0 0.0
  %300 = vmatpush1.msra.mxu0 0.0
  %301 = vmatprep.subr.mxu0 0.0
  %302 = vmatpush1.msra.mxu0 0.0
  %303 = vmatprep.subr.mxu0 0.0
  %304 = vmatpush1.msra.mxu0 0.0
  %305 = vmatprep.subr.mxu0 0.0
  %306 = vmatpush1.msra.mxu0 0.0
  %307 = vmatprep.subr.mxu0 0.0
  %308 = vmatpush1.msra.mxu0 0.0
  %309 = vmatprep.subr.mxu0 0.0
  %310 = vmatpush1.msra.mxu0 0.0
  %311 = vmatprep.subr.mxu0 0.0
  %312 = vmatpush1.msra.mxu0 0.0
  %313 = vmatprep.subr.mxu0 0.0
  %314 = vmatpush1.msra.mxu0 0.0
  %315 = vmatprep.subr.mxu0 0.0
  %316 = vmatpush1.msra.mxu0 0.0
  %317 = vmatprep.subr.mxu0 0.0
  %318 = vmatpush1.msra.mxu0 0.0
  %319 = vmatprep.subr.mxu0 0.0
  %320 = vmatpush1.msra.mxu0 0.0
  %321 = vmatprep.subr.mxu0 0.0
  %322 = vmatpush1.msra.mxu0 0.0
  %323 = vmatprep.subr.mxu0 0.0
  %324 = vmatpush1.msra.mxu0 0.0
  %325 = vmatprep.subr.mxu0 0.0
  %326 = vmatpush1.msra.mxu0 0.0
  %327 = vmatprep.subr.mxu0 0.0
  %328 = vmatpush1.msra.mxu0 0.0
  %329 = vmatprep.subr.mxu0 0.0
  %330 = vmatpush1.msra.mxu0 0.0
  %331 = vmatprep.subr.mxu0 0.0
  %332 = vmatpush1.msra.mxu0 0.0
  %333 = vmatprep.subr.mxu0 0.0
  %334 = vmatpush1.msra.mxu0 0.0
  %335 = vmatprep.subr.mxu0 0.0
  %336 = vmatpush1.msra.mxu0 0.0
  %337 = vmatprep.subr.mxu0 0.0
  %338 = vmatpush1.msra.mxu0 0.0
  %339 = vmatprep.subr.mxu0 0.0
  %340 = vmatpush1.msra.mxu0 0.0
  %341 = vmatprep.subr.mxu0 0.0
  %342 = vmatpush1.msra.mxu0 0.0
  %343 = vmatprep.subr.mxu0 0.0
  %344 = vmatpush1.msra.mxu0 0.0
  %345 = vmatprep.subr.mxu0 0.0
  %346 = vmatpush1.msra.mxu0 0.0
  %347 = vmatprep.mubr.f32.mxu0 0.0
  %348 = vmatmul.mubr.f32.gmra.mrb[0].mxu0 %v88
  %v349 = vpop.f32.mrb[0].mxu0
  %v350 = vadd.f32 %v84, %v349
  %v351 = vpop.f32.mrb[0].mxu0
  %352 = vmatprep.mubr.f32.mxu0 0.0
  %353 = vmatmul.mubr.f32.gmra.mrb[0].mxu0 %v91
  %v354 = vpop.f32.mrb[0].mxu0
  %v355 = vadd.f32 %v84, %v354
  %v356 = vpop.f32.mrb[0].mxu0
  %357 = vmatprep.mubr.f32.mxu0 0.0
  %358 = vmatmul.mubr.f32.gmra.mrb[0].mxu0 %v94
  %v359 = vpop.f32.mrb[0].mxu0
  %v360 = vadd.f32 %v84, %v359
  %v361 = vpop.f32.mrb[0].mxu0
  %362 = vmatprep.mubr.f32.mxu0 0.0
  %363 = vmatmul.mubr.f32.gmra.mrb[0].mxu0 %v97
  %v364 = vpop.f32.mrb[0].mxu0
  %v365 = vadd.f32 %v84, %v364
  %v366 = vpop.f32.mrb[0].mxu0
  %367 = vmatprep.mubr.f32.mxu0 0.0
  %368 = vmatmul.mubr.f32.gmra.mrb[0].mxu0 %v100
  %v369 = vpop.f32.mrb[0].mxu0
  %v370 = vadd.f32 %v84, %v369
  %v371 = vpop.f32.mrb[0].mxu0
  %372 = vmatprep.mubr.f32.mxu0 0.0
  %373 = vmatmul.mubr.f32.gmra.mrb[0].mxu0 %v103
  %v374 = vpop.f32.mrb[0].mxu0
  %v375 = vadd.f32 %v84, %v374
  %v376 = vpop.f32.mrb[0].mxu0
  %377 = vmatprep.mubr.f32.mxu0 0.0
  %378 = vmatmul.mubr.f32.gmra.mrb[0].mxu0 %v106
  %v379 = vpop.f32.mrb[0].mxu0
  %v380 = vadd.f32 %v84, %v379
  %v381 = vpop.f32.mrb[0].mxu0
  %382 = vmatprep.mubr.f32.mxu0 0.0
  %383 = vmatmul.mubr.f32.gmra.mrb[0].mxu0 %v109
  %v384 = vpop.f32.mrb[0].mxu0
  %v385 = vadd.f32 %v84, %v384
  %v386 = vpop.f32.mrb[0].mxu0
  %387 = vmatprep.mubr.f32.mxu0 0.0
  %388 = vmatmul.mubr.f32.gmra.mrb[0].mxu0 %v112
  %v389 = vpop.f32.mrb[0].mxu0
  %v390 = vadd.f32 %v84, %v389
  %v391 = vpop.f32.mrb[0].mxu0
  %392 = vmatprep.mubr.f32.mxu0 0.0
  %393 = vmatmul.mubr.f32.gmra.mrb[0].mxu0 %v115
  %v394 = vpop.f32.mrb[0].mxu0
  %v395 = vadd.f32 %v84, %v394
  %v396 = vpop.f32.mrb[0].mxu0
  %397 = vmatprep.mubr.f32.mxu0 0.0
  %398 = vmatmul.mubr.f32.gmra.mrb[0].mxu0 %v118
  %v399 = vpop.f32.mrb[0].mxu0
  %v400 = vadd.f32 %v84, %v399
  %v401 = vpop.f32.mrb[0].mxu0
  %402 = vmatprep.mubr.f32.mxu0 0.0
  %403 = vmatmul.mubr.f32.gmra.mrb[0].mxu0 %v121
  %v404 = vpop.f32.mrb[0].mxu0
  %v405 = vadd.f32 %v84, %v404
  %v406 = vpop.f32.mrb[0].mxu0
  %407 = vmatprep.mubr.f32.mxu0 0.0
  %408 = vmatmul.mubr.f32.gmra.mrb[0].mxu0 %v124
  %v409 = vpop.f32.mrb[0].mxu0
  %v410 = vadd.f32 %v84, %v409
  %v411 = vpop.f32.mrb[0].mxu0
  %412 = vmatprep.mubr.f32.mxu0 0.0
  %413 = vmatmul.mubr.f32.gmra.mrb[0].mxu0 %v127
  %v414 = vpop.f32.mrb[0].mxu0
  %v415 = vadd.f32 %v84, %v414
  %v416 = vpop.f32.mrb[0].mxu0
  %417 = vmatprep.mubr.f32.mxu0 0.0
  %418 = vmatmul.mubr.f32.gmra.mrb[0].mxu0 %v130
  %v419 = vpop.f32.mrb[0].mxu0
  %v420 = vadd.f32 %v84, %v419
  %v421 = vpop.f32.mrb[0].mxu0
  %422 = vmatprep.mubr.f32.mxu0 0.0
  %423 = vmatmul.mubr.f32.gmra.mrb[0].mxu0 %v133
  %v424 = vpop.f32.mrb[0].mxu0
  %v425 = vadd.f32 %v84, %v424
  %v426 = vpop.f32.mrb[0].mxu0
  %427 = vmatprep.mubr.f32.mxu0 0.0
  %428 = vmatmul.mubr.f32.gmra.mrb[0].mxu0 %v136
  %v429 = vpop.f32.mrb[0].mxu0
  %v430 = vadd.f32 %v84, %v429
  %v431 = vpop.f32.mrb[0].mxu0
  %432 = vmatprep.mubr.f32.mxu0 0.0
  %433 = vmatmul.mubr.f32.gmra.mrb[0].mxu0 %v139
  %v434 = vpop.f32.mrb[0].mxu0
  %v435 = vadd.f32 %v84, %v434
  %v436 = vpop.f32.mrb[0].mxu0
  %437 = vmatprep.mubr.f32.mxu0 0.0
  %438 = vmatmul.mubr.f32.gmra.mrb[0].mxu0 %v142
  %v439 = vpop.f32.mrb[0].mxu0
  %v440 = vadd.f32 %v84, %v439
  %v441 = vpop.f32.mrb[0].mxu0
  %442 = vmatprep.mubr.f32.mxu0 0.0
  %443 = vmatmul.mubr.f32.gmra.mrb[0].mxu0 %v145
  %v444 = vpop.f32.mrb[0].mxu0
  %v445 = vadd.f32 %v84, %v444
  %v446 = vpop.f32.mrb[0].mxu0
  %447 = vmatprep.mubr.f32.mxu0 0.0
  %448 = vmatmul.mubr.f32.gmra.mrb[0].mxu0 %v148
  %v449 = vpop.f32.mrb[0].mxu0
  %v450 = vadd.f32 %v84, %v449
  %v451 = vpop.f32.mrb[0].mxu0
  %452 = vmatprep.mubr.f32.mxu0 0.0
  %453 = vmatmul.mubr.f32.gmra.mrb[0].mxu0 %v151
  %v454 = vpop.f32.mrb[0].mxu0
  %v455 = vadd.f32 %v84, %v454
  %v456 = vpop.f32.mrb[0].mxu0
  %457 = vmatprep.mubr.f32.mxu0 0.0
  %458 = vmatmul.mubr.f32.gmra.mrb[0].mxu0 %v154
  %v459 = vpop.f32.mrb[0].mxu0
  %v460 = vadd.f32 %v84, %v459
  %v461 = vpop.f32.mrb[0].mxu0
  %462 = vmatprep.mubr.f32.mxu0 0.0
  %463 = vmatmul.mubr.f32.gmra.mrb[0].mxu0 %v157
  %v464 = vpop.f32.mrb[0].mxu0
  %v465 = vadd.f32 %v84, %v464
  %v466 = vpop.f32.mrb[0].mxu0
  %467 = vmatprep.mubr.f32.mxu0 0.0
  %468 = vmatmul.mubr.f32.gmra.mrb[0].mxu0 %v160
  %v469 = vpop.f32.mrb[0].mxu0
  %v470 = vadd.f32 %v84, %v469
  %v471 = vpop.f32.mrb[0].mxu0
  %472 = vmatprep.mubr.f32.mxu0 0.0
  %473 = vmatmul.mubr.f32.gmra.mrb[0].mxu0 %v163
  %v474 = vpop.f32.mrb[0].mxu0
  %v475 = vadd.f32 %v84, %v474
  %v476 = vpop.f32.mrb[0].mxu0
  %477 = vmatprep.mubr.f32.mxu0 0.0
  %478 = vmatmul.mubr.f32.gmra.mrb[0].mxu0 %v166
  %v479 = vpop.f32.mrb[0].mxu0
  %v480 = vadd.f32 %v84, %v479
  %v481 = vpop.f32.mrb[0].mxu0
  %482 = vmatprep.mubr.f32.mxu0 0.0
  %483 = vmatmul.mubr.f32.gmra.mrb[0].mxu0 %v169
  %v484 = vpop.f32.mrb[0].mxu0
  %v485 = vadd.f32 %v84, %v484
  %v486 = vpop.f32.mrb[0].mxu0
  %487 = vmatprep.mubr.f32.mxu0 0.0
  %488 = vmatmul.mubr.f32.gmra.mrb[0].mxu0 %v172
  %v489 = vpop.f32.mrb[0].mxu0
  %v490 = vadd.f32 %v84, %v489
  %v491 = vpop.f32.mrb[0].mxu0
  %492 = vmatprep.mubr.f32.mxu0 0.0
  %493 = vmatmul.mubr.f32.gmra.mrb[0].mxu0 %v175
  %v494 = vpop.f32.mrb[0].mxu0
  %v495 = vadd.f32 %v84, %v494
  %v496 = vpop.f32.mrb[0].mxu0
  %497 = vmatprep.mubr.f32.mxu0 0.0
  %498 = vmatmul.mubr.f32.gmra.mrb[0].mxu0 %v178
  %v499 = vpop.f32.mrb[0].mxu0
  %v500 = vadd.f32 %v84, %v499
  %v501 = vpop.f32.mrb[0].mxu0
  %502 = vmatprep.mubr.f32.mxu0 0.0
  %503 = vmatmul.mubr.f32.gmra.mrb[0].mxu0 %v181
  %v504 = vpop.f32.mrb[0].mxu0
  %v505 = vadd.f32 %v84, %v504
  %v506 = vpop.f32.mrb[0].mxu0
  %507 = vmatprep.mubr.f32.mxu0 0.0
  %508 = vmatmul.mubr.f32.gmra.mrb[0].mxu0 %v184
  %v509 = vpop.f32.mrb[0].mxu0
  %v510 = vadd.f32 %v84, %v509
  %v511 = vpop.f32.mrb[0].mxu0
  %512 = vmatprep.mubr.f32.mxu0 0.0
  %513 = vmatmul.mubr.f32.gmra.mrb[0].mxu0 %v187
  %v514 = vpop.f32.mrb[0].mxu0
  %v515 = vadd.f32 %v84, %v514
  %v516 = vpop.f32.mrb[0].mxu0
  %517 = vmatprep.mubr.f32.mxu0 0.0
  %518 = vmatmul.mubr.f32.gmra.mrb[0].mxu0 %v190
  %v519 = vpop.f32.mrb[0].mxu0
  %v520 = vadd.f32 %v84, %v519
  %v521 = vpop.f32.mrb[0].mxu0
  %522 = vmatprep.mubr.f32.mxu0 0.0
  %523 = vmatmul.mubr.f32.gmra.mrb[0].mxu0 %v193
  %v524 = vpop.f32.mrb[0].mxu0
  %v525 = vadd.f32 %v84, %v524
  %v526 = vpop.f32.mrb[0].mxu0
  %527 = vmatprep.mubr.f32.mxu0 0.0
  %528 = vmatmul.mubr.f32.gmra.mrb[0].mxu0 %v196
  %v529 = vpop.f32.mrb[0].mxu0
  %v530 = vadd.f32 %v84, %v529
  %v531 = vpop.f32.mrb[0].mxu0
  %532 = vmatprep.mubr.f32.mxu0 0.0
  %533 = vmatmul.mubr.f32.gmra.mrb[0].mxu0 %v199
  %v534 = vpop.f32.mrb[0].mxu0
  %v535 = vadd.f32 %v84, %v534
  %v536 = vpop.f32.mrb[0].mxu0
  %537 = vmatprep.mubr.f32.mxu0 0.0
  %538 = vmatmul.mubr.f32.gmra.mrb[0].mxu0 %v202
  %v539 = vpop.f32.mrb[0].mxu0
  %v540 = vadd.f32 %v84, %v539
  %v541 = vpop.f32.mrb[0].mxu0
  %542 = vmatprep.mubr.f32.mxu0 0.0
  %543 = vmatmul.mubr.f32.gmra.mrb[0].mxu0 %v205
  %v544 = vpop.f32.mrb[0].mxu0
  %v545 = vadd.f32 %v84, %v544
  %v546 = vpop.f32.mrb[0].mxu0
  %547 = vmatprep.mubr.f32.mxu0 0.0
  %548 = vmatmul.mubr.f32.gmra.mrb[0].mxu0 %v208
  %v549 = vpop.f32.mrb[0].mxu0
  %v550 = vadd.f32 %v84, %v549
  %v551 = vpop.f32.mrb[0].mxu0
  %552 = vmatprep.mubr.f32.mxu0 0.0
  %553 = vmatmul.mubr.f32.gmra.mrb[0].mxu0 %v211
  %v554 = vpop.f32.mrb[0].mxu0
  %v555 = vadd.f32 %v84, %v554
  %v556 = vpop.f32.mrb[0].mxu0
  %557 = vmatprep.mubr.f32.mxu0 0.0
  %558 = vmatmul.mubr.f32.gmra.mrb[0].mxu0 %v214
  %v559 = vpop.f32.mrb[0].mxu0
  %v560 = vadd.f32 %v84, %v559
  %v561 = vpop.f32.mrb[0].mxu0
  %562 = vmatprep.mubr.f32.mxu0 0.0
  %563 = vmatmul.mubr.f32.gmra.mrb[0].mxu0 %v217
  %v564 = vpop.f32.mrb[0].mxu0
  %v565 = vadd.f32 %v84, %v564
  %v566 = vpop.f32.mrb[0].mxu0
  %567 = vmatprep.mubr.f32.mxu0 0.0
  %568 = vmatmul.mubr.f32.gmra.mrb[0].mxu0 %v220
  %v569 = vpop.f32.mrb[0].mxu0
  %v570 = vadd.f32 %v84, %v569
  %v571 = vpop.f32.mrb[0].mxu0
  %572 = vmatprep.mubr.f32.mxu0 0.0
  %573 = vmatmul.mubr.f32.gmra.mrb[0].mxu0 %v223
  %v574 = vpop.f32.mrb[0].mxu0
  %v575 = vadd.f32 %v84, %v574
  %v576 = vpop.f32.mrb[0].mxu0
  %577 = vmatprep.mubr.f32.mxu0 0.0
  %578 = vmatmul.mubr.f32.gmra.mrb[0].mxu0 %v226
  %v579 = vpop.f32.mrb[0].mxu0
  %v580 = vadd.f32 %v84, %v579
  %v581 = vpop.f32.mrb[0].mxu0
  %582 = vmatprep.mubr.f32.mxu0 0.0
  %583 = vmatmul.mubr.f32.gmra.mrb[0].mxu0 %v229
  %v584 = vpop.f32.mrb[0].mxu0
  %v585 = vadd.f32 %v84, %v584
  %v586 = vpop.f32.mrb[0].mxu0
  %587 = vmatprep.mubr.f32.mxu0 0.0
  %588 = vmatmul.mubr.f32.gmra.mrb[0].mxu0 %v232
  %v589 = vpop.f32.mrb[0].mxu0
  %v590 = vadd.f32 %v84, %v589
  %v591 = vpop.f32.mrb[0].mxu0
  %592 = vmatprep.mubr.f32.mxu0 0.0
  %593 = vmatmul.mubr.f32.gmra.mrb[0].mxu0 %v235
  %v594 = vpop.f32.mrb[0].mxu0
  %v595 = vadd.f32 %v84, %v594
  %v596 = vpop.f32.mrb[0].mxu0
  %597 = vmatprep.mubr.f32.mxu0 0.0
  %598 = vmatmul.mubr.f32.gmra.mrb[0].mxu0 %v238
  %v599 = vpop.f32.mrb[0].mxu0
  %v600 = vadd.f32 %v84, %v599
  %v601 = vpop.f32.mrb[0].mxu0
  %602 = vmatprep.mubr.f32.mxu0 0.0
  %603 = vmatmul.mubr.f32.gmra.mrb[0].mxu0 %v241
  %v604 = vpop.f32.mrb[0].mxu0
  %v605 = vadd.f32 %v84, %v604
  %v606 = vpop.f32.mrb[0].mxu0
  %607 = vmatprep.mubr.f32.mxu0 0.0
  %608 = vmatmul.mubr.f32.gmra.mrb[0].mxu0 %v244
  %v609 = vpop.f32.mrb[0].mxu0
  %v610 = vadd.f32 %v84, %v609
  %v611 = vpop.f32.mrb[0].mxu0
  %612 = vmatprep.mubr.f32.mxu0 0.0
  %613 = vmatmul.mubr.f32.gmra.mrb[0].mxu0 %v247
  %v614 = vpop.f32.mrb[0].mxu0
  %v615 = vadd.f32 %v84, %v614
  %v616 = vpop.f32.mrb[0].mxu0
  %617 = vmatprep.mubr.f32.mxu0 0.0
  %618 = vmatmul.mubr.f32.gmra.mrb[0].mxu0 %v250
  %v619 = vpop.f32.mrb[0].mxu0
  %v620 = vadd.f32 %v84, %v619
  %v621 = vpop.f32.mrb[0].mxu0
  %622 = vmatprep.mubr.f32.mxu0 0.0
  %623 = vmatmul.mubr.f32.gmra.mrb[0].mxu0 %v253
  %v624 = vpop.f32.mrb[0].mxu0
  %v625 = vadd.f32 %v84, %v624
  %v626 = vpop.f32.mrb[0].mxu0
  %627 = vmatprep.mubr.f32.mxu0 0.0
  %628 = vmatmul.mubr.f32.gmra.mrb[0].mxu0 %v256
  %v629 = vpop.f32.mrb[0].mxu0
  %v630 = vadd.f32 %v84, %v629
  %v631 = vpop.f32.mrb[0].mxu0
  %632 = vmatprep.mubr.f32.mxu0 0.0
  %633 = vmatmul.mubr.f32.gmra.mrb[0].mxu0 %v259
  %v634 = vpop.f32.mrb[0].mxu0
  %v635 = vadd.f32 %v84, %v634
  %v636 = vpop.f32.mrb[0].mxu0
  %637 = vmatprep.mubr.f32.mxu0 0.0
  %638 = vmatmul.mubr.f32.gmra.mrb[0].mxu0 %v262
  %v639 = vpop.f32.mrb[0].mxu0
  %v640 = vadd.f32 %v84, %v639
  %v641 = vpop.f32.mrb[0].mxu0
  %642 = vmatprep.mubr.f32.mxu0 0.0
  %643 = vmatmul.mubr.f32.gmra.mrb[0].mxu0 %v265
  %v644 = vpop.f32.mrb[0].mxu0
  %v645 = vadd.f32 %v84, %v644
  %v646 = vpop.f32.mrb[0].mxu0
  %647 = vmatprep.mubr.f32.mxu0 0.0
  %648 = vmatmul.mubr.f32.gmra.mrb[0].mxu0 %v268
  %v649 = vpop.f32.mrb[0].mxu0
  %v650 = vadd.f32 %v84, %v649
  %v651 = vpop.f32.mrb[0].mxu0
  %652 = vmatprep.mubr.f32.mxu0 0.0
  %653 = vmatmul.mubr.f32.gmra.mrb[0].mxu0 %v271
  %v654 = vpop.f32.mrb[0].mxu0
  %v655 = vadd.f32 %v84, %v654
  %v656 = vpop.f32.mrb[0].mxu0
  %657 = vmatprep.mubr.f32.mxu0 0.0
  %658 = vmatmul.mubr.f32.gmra.mrb[0].mxu0 %v274
  %v659 = vpop.f32.mrb[0].mxu0
  %v660 = vadd.f32 %v84, %v659
  %v661 = vpop.f32.mrb[0].mxu0
  %662 = vmatprep.mubr.f32.mxu0 0.0
  %663 = vmatmul.mubr.f32.gmra.mrb[0].mxu0 %v277
  %v664 = vpop.f32.mrb[0].mxu0
  %v665 = vadd.f32 %v84, %v664
  %v666 = vpop.f32.mrb[0].mxu0
  %667 = vdwg.mxu0
  %v668 = vxor.u32 %v350, 2147483648
  %v669 = vxor.u32 %v355, 2147483648
  %v670 = vxor.u32 %v360, 2147483648
  %v671 = vxor.u32 %v365, 2147483648
  %v672 = vxor.u32 %v370, 2147483648
  %v673 = vxor.u32 %v375, 2147483648
  %v674 = vxor.u32 %v380, 2147483648
  %v675 = vxor.u32 %v385, 2147483648
  %v676 = vxor.u32 %v390, 2147483648
  %v677 = vxor.u32 %v395, 2147483648
  %v678 = vxor.u32 %v400, 2147483648
  %v679 = vxor.u32 %v405, 2147483648
  %v680 = vxor.u32 %v410, 2147483648
  %v681 = vxor.u32 %v415, 2147483648
  %v682 = vxor.u32 %v420, 2147483648
  %v683 = vxor.u32 %v425, 2147483648
  %v684 = vxor.u32 %v430, 2147483648
  %v685 = vxor.u32 %v435, 2147483648
  %v686 = vxor.u32 %v440, 2147483648
  %v687 = vxor.u32 %v445, 2147483648
  %v688 = vxor.u32 %v450, 2147483648
  %v689 = vxor.u32 %v455, 2147483648
  %v690 = vxor.u32 %v460, 2147483648
  %v691 = vxor.u32 %v465, 2147483648
  %v692 = vxor.u32 %v470, 2147483648
  %v693 = vxor.u32 %v475, 2147483648
  %v694 = vxor.u32 %v480, 2147483648
  %v695 = vxor.u32 %v485, 2147483648
  %v696 = vxor.u32 %v490, 2147483648
  %v697 = vxor.u32 %v495, 2147483648
  %v698 = vxor.u32 %v500, 2147483648
  %v699 = vxor.u32 %v505, 2147483648
  %v700 = vxor.u32 %v510, 2147483648
  %v701 = vxor.u32 %v515, 2147483648
  %v702 = vxor.u32 %v520, 2147483648
  %v703 = vxor.u32 %v525, 2147483648
  %v704 = vxor.u32 %v530, 2147483648
  %v705 = vxor.u32 %v535, 2147483648
  %v706 = vxor.u32 %v540, 2147483648
  %v707 = vxor.u32 %v545, 2147483648
  %v708 = vxor.u32 %v550, 2147483648
  %v709 = vxor.u32 %v555, 2147483648
  %v710 = vxor.u32 %v560, 2147483648
  %v711 = vxor.u32 %v565, 2147483648
  %v712 = vxor.u32 %v570, 2147483648
  %v713 = vxor.u32 %v575, 2147483648
  %v714 = vxor.u32 %v580, 2147483648
  %v715 = vxor.u32 %v585, 2147483648
  %v716 = vxor.u32 %v590, 2147483648
  %v717 = vxor.u32 %v595, 2147483648
  %v718 = vxor.u32 %v600, 2147483648
  %v719 = vxor.u32 %v605, 2147483648
  %v720 = vxor.u32 %v610, 2147483648
  %v721 = vxor.u32 %v615, 2147483648
  %v722 = vxor.u32 %v620, 2147483648
  %v723 = vxor.u32 %v625, 2147483648
  %v724 = vxor.u32 %v630, 2147483648
  %v725 = vxor.u32 %v635, 2147483648
  %v726 = vxor.u32 %v640, 2147483648
  %v727 = vxor.u32 %v645, 2147483648
  %v728 = vxor.u32 %v650, 2147483648
  %v729 = vxor.u32 %v655, 2147483648
  %v730 = vxor.u32 %v660, 2147483648
  %v731 = vxor.u32 %v665, 2147483648
  %v732 = vmul.f32 %v668, 1.442695
  %v733 = vpow.pop %v732
  %v734 = vmul.f32 %v669, 1.442695
  %v735 = vpow.pop %v734
  %v736 = vmul.f32 %v670, 1.442695
  %v737 = vpow.pop %v736
  %v738 = vmul.f32 %v671, 1.442695
  %v739 = vpow.pop %v738
  %v740 = vmul.f32 %v672, 1.442695
  %v741 = vpow.pop %v740
  %v742 = vmul.f32 %v673, 1.442695
  %v743 = vpow.pop %v742
  %v744 = vmul.f32 %v674, 1.442695
  %v745 = vpow.pop %v744
  %v746 = vmul.f32 %v675, 1.442695
  %v747 = vpow.pop %v746
  %v748 = vmul.f32 %v676, 1.442695
  %v749 = vpow.pop %v748
  %v750 = vmul.f32 %v677, 1.442695
  %v751 = vpow.pop %v750
  %v752 = vmul.f32 %v678, 1.442695
  %v753 = vpow.pop %v752
  %v754 = vmul.f32 %v679, 1.442695
  %v755 = vpow.pop %v754
  %v756 = vmul.f32 %v680, 1.442695
  %v757 = vpow.pop %v756
  %v758 = vmul.f32 %v681, 1.442695
  %v759 = vpow.pop %v758
  %v760 = vmul.f32 %v682, 1.442695
  %v761 = vpow.pop %v760
  %v762 = vmul.f32 %v683, 1.442695
  %v763 = vpow.pop %v762
  %v764 = vmul.f32 %v684, 1.442695
  %v765 = vpow.pop %v764
  %v766 = vmul.f32 %v685, 1.442695
  %v767 = vpow.pop %v766
  %v768 = vmul.f32 %v686, 1.442695
  %v769 = vpow.pop %v768
  %v770 = vmul.f32 %v687, 1.442695
  %v771 = vpow.pop %v770
  %v772 = vmul.f32 %v688, 1.442695
  %v773 = vpow.pop %v772
  %v774 = vmul.f32 %v689, 1.442695
  %v775 = vpow.pop %v774
  %v776 = vmul.f32 %v690, 1.442695
  %v777 = vpow.pop %v776
  %v778 = vmul.f32 %v691, 1.442695
  %v779 = vpow.pop %v778
  %v780 = vmul.f32 %v692, 1.442695
  %v781 = vpow.pop %v780
  %v782 = vmul.f32 %v693, 1.442695
  %v783 = vpow.pop %v782
  %v784 = vmul.f32 %v694, 1.442695
  %v785 = vpow.pop %v784
  %v786 = vmul.f32 %v695, 1.442695
  %v787 = vpow.pop %v786
  %v788 = vmul.f32 %v696, 1.442695
  %v789 = vpow.pop %v788
  %v790 = vmul.f32 %v697, 1.442695
  %v791 = vpow.pop %v790
  %v792 = vmul.f32 %v698, 1.442695
  %v793 = vpow.pop %v792
  %v794 = vmul.f32 %v699, 1.442695
  %v795 = vpow.pop %v794
  %v796 = vmul.f32 %v700, 1.442695
  %v797 = vpow.pop %v796
  %v798 = vmul.f32 %v701, 1.442695
  %v799 = vpow.pop %v798
  %v800 = vmul.f32 %v702, 1.442695
  %v801 = vpow.pop %v800
  %v802 = vmul.f32 %v703, 1.442695
  %v803 = vpow.pop %v802
  %v804 = vmul.f32 %v704, 1.442695
  %v805 = vpow.pop %v804
  %v806 = vmul.f32 %v705, 1.442695
  %v807 = vpow.pop %v806
  %v808 = vmul.f32 %v706, 1.442695
  %v809 = vpow.pop %v808
  %v810 = vmul.f32 %v707, 1.442695
  %v811 = vpow.pop %v810
  %v812 = vmul.f32 %v708, 1.442695
  %v813 = vpow.pop %v812
  %v814 = vmul.f32 %v709, 1.442695
  %v815 = vpow.pop %v814
  %v816 = vmul.f32 %v710, 1.442695
  %v817 = vpow.pop %v816
  %v818 = vmul.f32 %v711, 1.442695
  %v819 = vpow.pop %v818
  %v820 = vmul.f32 %v712, 1.442695
  %v821 = vpow.pop %v820
  %v822 = vmul.f32 %v713, 1.442695
  %v823 = vpow.pop %v822
  %v824 = vmul.f32 %v714, 1.442695
  %v825 = vpow.pop %v824
  %v826 = vmul.f32 %v715, 1.442695
  %v827 = vpow.pop %v826
  %v828 = vmul.f32 %v716, 1.442695
  %v829 = vpow.pop %v828
  %v830 = vmul.f32 %v717, 1.442695
  %v831 = vpow.pop %v830
  %v832 = vmul.f32 %v718, 1.442695
  %v833 = vpow.pop %v832
  %v834 = vmul.f32 %v719, 1.442695
  %v835 = vpow.pop %v834
  %v836 = vmul.f32 %v720, 1.442695
  %v837 = vpow.pop %v836
  %v838 = vmul.f32 %v721, 1.442695
  %v839 = vpow.pop %v838
  %v840 = vmul.f32 %v722, 1.442695
  %v841 = vpow.pop %v840
  %v842 = vmul.f32 %v723, 1.442695
  %v843 = vpow.pop %v842
  %v844 = vmul.f32 %v724, 1.442695
  %v845 = vpow.pop %v844
  %v846 = vmul.f32 %v725, 1.442695
  %v847 = vpow.pop %v846
  %v848 = vmul.f32 %v726, 1.442695
  %v849 = vpow.pop %v848
  %v850 = vmul.f32 %v727, 1.442695
  %v851 = vpow.pop %v850
  %v852 = vmul.f32 %v728, 1.442695
  %v853 = vpow.pop %v852
  %v854 = vmul.f32 %v729, 1.442695
  %v855 = vpow.pop %v854
  %v856 = vmul.f32 %v730, 1.442695
  %v857 = vpow.pop %v856
  %v858 = vmul.f32 %v731, 1.442695
  %v859 = vpow.pop %v858
  %v860 = vadd.f32 %v733, 1.0
  %v861 = vadd.f32 %v735, 1.0
  %v862 = vadd.f32 %v737, 1.0
  %v863 = vadd.f32 %v739, 1.0
  %v864 = vadd.f32 %v741, 1.0
  %v865 = vadd.f32 %v743, 1.0
  %v866 = vadd.f32 %v745, 1.0
  %v867 = vadd.f32 %v747, 1.0
  %v868 = vadd.f32 %v749, 1.0
  %v869 = vadd.f32 %v751, 1.0
  %v870 = vadd.f32 %v753, 1.0
  %v871 = vadd.f32 %v755, 1.0
  %v872 = vadd.f32 %v757, 1.0
  %v873 = vadd.f32 %v759, 1.0
  %v874 = vadd.f32 %v761, 1.0
  %v875 = vadd.f32 %v763, 1.0
  %v876 = vadd.f32 %v765, 1.0
  %v877 = vadd.f32 %v767, 1.0
  %v878 = vadd.f32 %v769, 1.0
  %v879 = vadd.f32 %v771, 1.0
  %v880 = vadd.f32 %v773, 1.0
  %v881 = vadd.f32 %v775, 1.0
  %v882 = vadd.f32 %v777, 1.0
  %v883 = vadd.f32 %v779, 1.0
  %v884 = vadd.f32 %v781, 1.0
  %v885 = vadd.f32 %v783, 1.0
  %v886 = vadd.f32 %v785, 1.0
  %v887 = vadd.f32 %v787, 1.0
  %v888 = vadd.f32 %v789, 1.0
  %v889 = vadd.f32 %v791, 1.0
  %v890 = vadd.f32 %v793, 1.0
  %v891 = vadd.f32 %v795, 1.0
  %v892 = vadd.f32 %v797, 1.0
  %v893 = vadd.f32 %v799, 1.0
  %v894 = vadd.f32 %v801, 1.0
  %v895 = vadd.f32 %v803, 1.0
  %v896 = vadd.f32 %v805, 1.0
  %v897 = vadd.f32 %v807, 1.0
  %v898 = vadd.f32 %v809, 1.0
  %v899 = vadd.f32 %v811, 1.0
  %v900 = vadd.f32 %v813, 1.0
  %v901 = vadd.f32 %v815, 1.0
  %v902 = vadd.f32 %v817, 1.0
  %v903 = vadd.f32 %v819, 1.0
  %v904 = vadd.f32 %v821, 1.0
  %v905 = vadd.f32 %v823, 1.0
  %v906 = vadd.f32 %v825, 1.0
  %v907 = vadd.f32 %v827, 1.0
  %v908 = vadd.f32 %v829, 1.0
  %v909 = vadd.f32 %v831, 1.0
  %v910 = vadd.f32 %v833, 1.0
  %v911 = vadd.f32 %v835, 1.0
  %v912 = vadd.f32 %v837, 1.0
  %v913 = vadd.f32 %v839, 1.0
  %v914 = vadd.f32 %v841, 1.0
  %v915 = vadd.f32 %v843, 1.0
  %v916 = vadd.f32 %v845, 1.0
  %v917 = vadd.f32 %v847, 1.0
  %v918 = vadd.f32 %v849, 1.0
  %v919 = vadd.f32 %v851, 1.0
  %v920 = vadd.f32 %v853, 1.0
  %v921 = vadd.f32 %v855, 1.0
  %v922 = vadd.f32 %v857, 1.0
  %v923 = vadd.f32 %v859, 1.0
  %v924 = vrcp.pop %v860
  %v925 = vmul.f32 1.0, %v924
  %v926 = vrcp.pop %v861
  %v927 = vmul.f32 1.0, %v926
  %v928 = vrcp.pop %v862
  %v929 = vmul.f32 1.0, %v928
  %v930 = vrcp.pop %v863
  %v931 = vmul.f32 1.0, %v930
  %v932 = vrcp.pop %v864
  %v933 = vmul.f32 1.0, %v932
  %v934 = vrcp.pop %v865
  %v935 = vmul.f32 1.0, %v934
  %v936 = vrcp.pop %v866
  %v937 = vmul.f32 1.0, %v936
  %v938 = vrcp.pop %v867
  %v939 = vmul.f32 1.0, %v938
  %v940 = vrcp.pop %v868
  %v941 = vmul.f32 1.0, %v940
  %v942 = vrcp.pop %v869
  %v943 = vmul.f32 1.0, %v942
  %v944 = vrcp.pop %v870
  %v945 = vmul.f32 1.0, %v944
  %v946 = vrcp.pop %v871
  %v947 = vmul.f32 1.0, %v946
  %v948 = vrcp.pop %v872
  %v949 = vmul.f32 1.0, %v948
  %v950 = vrcp.pop %v873
  %v951 = vmul.f32 1.0, %v950
  %v952 = vrcp.pop %v874
  %v953 = vmul.f32 1.0, %v952
  %v954 = vrcp.pop %v875
  %v955 = vmul.f32 1.0, %v954
  %v956 = vrcp.pop %v876
  %v957 = vmul.f32 1.0, %v956
  %v958 = vrcp.pop %v877
  %v959 = vmul.f32 1.0, %v958
  %v960 = vrcp.pop %v878
  %v961 = vmul.f32 1.0, %v960
  %v962 = vrcp.pop %v879
  %v963 = vmul.f32 1.0, %v962
  %v964 = vrcp.pop %v880
  %v965 = vmul.f32 1.0, %v964
  %v966 = vrcp.pop %v881
  %v967 = vmul.f32 1.0, %v966
  %v968 = vrcp.pop %v882
  %v969 = vmul.f32 1.0, %v968
  %v970 = vrcp.pop %v883
  %v971 = vmul.f32 1.0, %v970
  %v972 = vrcp.pop %v884
  %v973 = vmul.f32 1.0, %v972
  %v974 = vrcp.pop %v885
  %v975 = vmul.f32 1.0, %v974
  %v976 = vrcp.pop %v886
  %v977 = vmul.f32 1.0, %v976
  %v978 = vrcp.pop %v887
  %v979 = vmul.f32 1.0, %v978
  %v980 = vrcp.pop %v888
  %v981 = vmul.f32 1.0, %v980
  %v982 = vrcp.pop %v889
  %v983 = vmul.f32 1.0, %v982
  %v984 = vrcp.pop %v890
  %v985 = vmul.f32 1.0, %v984
  %v986 = vrcp.pop %v891
  %v987 = vmul.f32 1.0, %v986
  %v988 = vrcp.pop %v892
  %v989 = vmul.f32 1.0, %v988
  %v990 = vrcp.pop %v893
  %v991 = vmul.f32 1.0, %v990
  %v992 = vrcp.pop %v894
  %v993 = vmul.f32 1.0, %v992
  %v994 = vrcp.pop %v895
  %v995 = vmul.f32 1.0, %v994
  %v996 = vrcp.pop %v896
  %v997 = vmul.f32 1.0, %v996
  %v998 = vrcp.pop %v897
  %v999 = vmul.f32 1.0, %v998
  %v1000 = vrcp.pop %v898
  %v1001 = vmul.f32 1.0, %v1000
  %v1002 = vrcp.pop %v899
  %v1003 = vmul.f32 1.0, %v1002
  %v1004 = vrcp.pop %v900
  %v1005 = vmul.f32 1.0, %v1004
  %v1006 = vrcp.pop %v901
  %v1007 = vmul.f32 1.0, %v1006
  %v1008 = vrcp.pop %v902
  %v1009 = vmul.f32 1.0, %v1008
  %v1010 = vrcp.pop %v903
  %v1011 = vmul.f32 1.0, %v1010
  %v1012 = vrcp.pop %v904
  %v1013 = vmul.f32 1.0, %v1012
  %v1014 = vrcp.pop %v905
  %v1015 = vmul.f32 1.0, %v1014
  %v1016 = vrcp.pop %v906
  %v1017 = vmul.f32 1.0, %v1016
  %v1018 = vrcp.pop %v907
  %v1019 = vmul.f32 1.0, %v1018
  %v1020 = vrcp.pop %v908
  %v1021 = vmul.f32 1.0, %v1020
  %v1022 = vrcp.pop %v909
  %v1023 = vmul.f32 1.0, %v1022
  %v1024 = vrcp.pop %v910
  %v1025 = vmul.f32 1.0, %v1024
  %v1026 = vrcp.pop %v911
  %v1027 = vmul.f32 1.0, %v1026
  %v1028 = vrcp.pop %v912
  %v1029 = vmul.f32 1.0, %v1028
  %v1030 = vrcp.pop %v913
  %v1031 = vmul.f32 1.0, %v1030
  %v1032 = vrcp.pop %v914
  %v1033 = vmul.f32 1.0, %v1032
  %v1034 = vrcp.pop %v915
  %v1035 = vmul.f32 1.0, %v1034
  %v1036 = vrcp.pop %v916
  %v1037 = vmul.f32 1.0, %v1036
  %v1038 = vrcp.pop %v917
  %v1039 = vmul.f32 1.0, %v1038
  %v1040 = vrcp.pop %v918
  %v1041 = vmul.f32 1.0, %v1040
  %v1042 = vrcp.pop %v919
  %v1043 = vmul.f32 1.0, %v1042
  %v1044 = vrcp.pop %v920
  %v1045 = vmul.f32 1.0, %v1044
  %v1046 = vrcp.pop %v921
  %v1047 = vmul.f32 1.0, %v1046
  %v1048 = vrcp.pop %v922
  %v1049 = vmul.f32 1.0, %v1048
  %v1050 = vrcp.pop %v923
  %v1051 = vmul.f32 1.0, %v1050
  %vm1052 = vcmask 187392
  %1053 = vst.msk [vmem:[%s3] sm:$0xff] %vm1052, %v925
  %1054 = vst.msk [vmem:[%s3 + $0x8] sm:$0xff] %vm1052, %v927
  %1055 = vst.msk [vmem:[%s3 + $0x10] sm:$0xff] %vm1052, %v929
  %1056 = vst.msk [vmem:[%s3 + $0x18] sm:$0xff] %vm1052, %v931
  %1057 = vst.msk [vmem:[%s3 + $0x20] sm:$0xff] %vm1052, %v933
  %1058 = vst.msk [vmem:[%s3 + $0x28] sm:$0xff] %vm1052, %v935
  %1059 = vst.msk [vmem:[%s3 + $0x30] sm:$0xff] %vm1052, %v937
  %1060 = vst.msk [vmem:[%s3 + $0x38] sm:$0xff] %vm1052, %v939
  %1061 = vst.msk [vmem:[%s3 + $0x40] sm:$0xff] %vm1052, %v941
  %1062 = vst.msk [vmem:[%s3 + $0x48] sm:$0xff] %vm1052, %v943
  %1063 = vst.msk [vmem:[%s3 + $0x50] sm:$0xff] %vm1052, %v945
  %1064 = vst.msk [vmem:[%s3 + $0x58] sm:$0xff] %vm1052, %v947
  %1065 = vst.msk [vmem:[%s3 + $0x60] sm:$0xff] %vm1052, %v949
  %1066 = vst.msk [vmem:[%s3 + $0x68] sm:$0xff] %vm1052, %v951
  %1067 = vst.msk [vmem:[%s3 + $0x70] sm:$0xff] %vm1052, %v953
  %1068 = vst.msk [vmem:[%s3 + $0x78] sm:$0xff] %vm1052, %v955
  %1069 = vst.msk [vmem:[%s3 + $0x80] sm:$0xff] %vm1052, %v957
  %1070 = vst.msk [vmem:[%s3 + $0x88] sm:$0xff] %vm1052, %v959
  %1071 = vst.msk [vmem:[%s3 + $0x90] sm:$0xff] %vm1052, %v961
  %1072 = vst.msk [vmem:[%s3 + $0x98] sm:$0xff] %vm1052, %v963
  %1073 = vst.msk [vmem:[%s3 + $0xa0] sm:$0xff] %vm1052, %v965
  %1074 = vst.msk [vmem:[%s3 + $0xa8] sm:$0xff] %vm1052, %v967
  %1075 = vst.msk [vmem:[%s3 + $0xb0] sm:$0xff] %vm1052, %v969
  %1076 = vst.msk [vmem:[%s3 + $0xb8] sm:$0xff] %vm1052, %v971
  %1077 = vst.msk [vmem:[%s3 + $0xc0] sm:$0xff] %vm1052, %v973
  %1078 = vst.msk [vmem:[%s3 + $0xc8] sm:$0xff] %vm1052, %v975
  %1079 = vst.msk [vmem:[%s3 + $0xd0] sm:$0xff] %vm1052, %v977
  %1080 = vst.msk [vmem:[%s3 + $0xd8] sm:$0xff] %vm1052, %v979
  %1081 = vst.msk [vmem:[%s3 + $0xe0] sm:$0xff] %vm1052, %v981
  %1082 = vst.msk [vmem:[%s3 + $0xe8] sm:$0xff] %vm1052, %v983
  %1083 = vst.msk [vmem:[%s3 + $0xf0] sm:$0xff] %vm1052, %v985
  %1084 = vst.msk [vmem:[%s3 + $0xf8] sm:$0xff] %vm1052, %v987
  %1085 = vst.msk [vmem:[%s3 + $0x100] sm:$0xff] %vm1052, %v989
  %1086 = vst.msk [vmem:[%s3 + $0x108] sm:$0xff] %vm1052, %v991
  %1087 = vst.msk [vmem:[%s3 + $0x110] sm:$0xff] %vm1052, %v993
  %1088 = vst.msk [vmem:[%s3 + $0x118] sm:$0xff] %vm1052, %v995
  %1089 = vst.msk [vmem:[%s3 + $0x120] sm:$0xff] %vm1052, %v997
  %1090 = vst.msk [vmem:[%s3 + $0x128] sm:$0xff] %vm1052, %v999
  %1091 = vst.msk [vmem:[%s3 + $0x130] sm:$0xff] %vm1052, %v1001
  %1092 = vst.msk [vmem:[%s3 + $0x138] sm:$0xff] %vm1052, %v1003
  %1093 = vst.msk [vmem:[%s3 + $0x140] sm:$0xff] %vm1052, %v1005
  %1094 = vst.msk [vmem:[%s3 + $0x148] sm:$0xff] %vm1052, %v1007
  %1095 = vst.msk [vmem:[%s3 + $0x150] sm:$0xff] %vm1052, %v1009
  %1096 = vst.msk [vmem:[%s3 + $0x158] sm:$0xff] %vm1052, %v1011
  %1097 = vst.msk [vmem:[%s3 + $0x160] sm:$0xff] %vm1052, %v1013
  %1098 = vst.msk [vmem:[%s3 + $0x168] sm:$0xff] %vm1052, %v1015
  %1099 = vst.msk [vmem:[%s3 + $0x170] sm:$0xff] %vm1052, %v1017
  %1100 = vst.msk [vmem:[%s3 + $0x178] sm:$0xff] %vm1052, %v1019
  %1101 = vst.msk [vmem:[%s3 + $0x180] sm:$0xff] %vm1052, %v1021
  %1102 = vst.msk [vmem:[%s3 + $0x188] sm:$0xff] %vm1052, %v1023
  %1103 = vst.msk [vmem:[%s3 + $0x190] sm:$0xff] %vm1052, %v1025
  %1104 = vst.msk [vmem:[%s3 + $0x198] sm:$0xff] %vm1052, %v1027
  %1105 = vst.msk [vmem:[%s3 + $0x1a0] sm:$0xff] %vm1052, %v1029
  %1106 = vst.msk [vmem:[%s3 + $0x1a8] sm:$0xff] %vm1052, %v1031
  %1107 = vst.msk [vmem:[%s3 + $0x1b0] sm:$0xff] %vm1052, %v1033
  %1108 = vst.msk [vmem:[%s3 + $0x1b8] sm:$0xff] %vm1052, %v1035
  %1109 = vst.msk [vmem:[%s3 + $0x1c0] sm:$0xff] %vm1052, %v1037
  %1110 = vst.msk [vmem:[%s3 + $0x1c8] sm:$0xff] %vm1052, %v1039
  %1111 = vst.msk [vmem:[%s3 + $0x1d0] sm:$0xff] %vm1052, %v1041
  %1112 = vst.msk [vmem:[%s3 + $0x1d8] sm:$0xff] %vm1052, %v1043
  %1113 = vst.msk [vmem:[%s3 + $0x1e0] sm:$0xff] %vm1052, %v1045
  %1114 = vst.msk [vmem:[%s3 + $0x1e8] sm:$0xff] %vm1052, %v1047
  %1115 = vst.msk [vmem:[%s3 + $0x1f0] sm:$0xff] %vm1052, %v1049
  %1116 = vst.msk [vmem:[%s3 + $0x1f8] sm:$0xff] %vm1052, %v1051
  // Predicated region
  $region14: #{mlp_forward.1} parent=0 // pred_check
    _
  $region15: #{mlp_forward.1} parent=0 // pred_check_branch
    %1118 = sbr.rel (0) target = $region17
  $region16: #{mlp_forward.1} parent=0 // pred_region
    _
  $region17: #{mlp_forward.1} parent=0 // pred_fallthru
    _
  // Predicated region
  $region18: #{mlp_forward.1} parent=0 // pred_check
    _
  $region19: #{mlp_forward.1} parent=0 // pred_check_branch
    %1120 = sbr.rel (0) target = $region21
  $region20: #{mlp_forward.1} parent=0 // pred_region
    _
  $region21: #{mlp_forward.1} parent=0 // pred_fallthru
    _

</llo_original>
